<compile_context>
chip_gen: v7x
topology: tpu7x:2x2x1
jax: 0.10.0
libtpu: 0.0.40
codegen_flags: <defaults>
</compile_context>

<pallas_src>
import math
from functools import partial

import jax
import jax.numpy as jnp
from jax.experimental import pallas as pl
from jax.experimental.pallas import tpu as pltpu


# ----------------------------------------------------------------------------
# Fused Pallas kernel: conv1(GIB) -> conv1_1 -> conv5(GIB) -> conv5_1
# ----------------------------------------------------------------------------
def _hgib_fused_kernel(x_ref, hv_ref, hte_ref,
                       wt1_ref, b1_ref, att1t_ref,
                       wt11_ref, b11_ref,
                       wt5_ref, b5_ref, att5t_ref,
                       wt51_ref, b51_ref,
                       y1_ref, y5_ref, kl_ref):
    bf16 = jnp.bfloat16
    hv = hv_ref[...]        # (N, E)  Dv^{-1} H        (bf16, pre-normalized)
    hte = hte_ref[...]      # (E, N)  De^{-1} H^T      (bf16, pre-normalized)

    n = x_ref.shape[0]
    heads = att1t_ref.shape[1]

    # one-hot head selector sel[i, j] = (i % heads == j), built in-kernel
    # (cheap VPU iota/compare hidden under MXU slack; no DMA'd input).
    if heads & (heads - 1) == 0:
        row_head = jax.lax.broadcasted_iota(jnp.int32, (n, heads), 0) & (heads - 1)
    else:
        row_head = jax.lax.broadcasted_iota(jnp.int32, (n, heads), 0) % heads
    col = jax.lax.broadcasted_iota(jnp.int32, (n, heads), 1)
    sel = (row_head == col).astype(jnp.float32)

    def v2v(z):
        # v2e(mean) -> e2v(mean):  Dv^{-1} H (De^{-1} H^T z); bf16 MXU, f32 accum
        zb = z.astype(bf16)
        me = jnp.dot(hte, zb, preferred_element_type=jnp.float32)          # (E, C)
        return jnp.dot(hv, me.astype(bf16), preferred_element_type=jnp.float32)

    def gib_kl(zr, att_t):
        # alpha_i = mean_c(zr[i, c] * att[i % heads, c])
        #   == row i, column (i % heads) of (zr @ att^T) / C, selected via sel.
        c = att_t.shape[0]
        scores = jnp.dot(zr.astype(bf16), att_t,
                         preferred_element_type=jnp.float32) * (1.0 / c)   # (N, heads)
        alpha = jnp.sum(scores * sel, axis=-1, keepdims=True)              # (N, 1)
        alpha = jnp.where(alpha >= 0.0, alpha, 0.2 * alpha)                # leaky_relu(0.2)
        alpha = jnp.clip(jax.nn.sigmoid(alpha), 0.01, 0.99)
        # KL( Bernoulli(alpha) || Bernoulli(0.5) ), summed over vertices
        kl = alpha * jnp.log(2.0 * alpha) + (1.0 - alpha) * jnp.log(2.0 * (1.0 - alpha))
        return jnp.sum(kl)

    # conv1 (GIB, is_last=False): theta -> v2v(mean) -> ReLU (dropout = identity)
    z1 = jnp.dot(x_ref[...], wt1_ref[...],
                 preferred_element_type=jnp.float32) + b1_ref[...]
    x1 = jnp.maximum(v2v(z1), 0.0)                                         # (N, n_hid)
    kl1 = gib_kl(x1, att1t_ref[...])

    # Shared v2v(x1) — reused by conv1_1 and conv5 (v2v is linear; theta/bias
    # commute with v2v for any hypergraph with all vertex/edge degrees >= 1).
    u1b = v2v(x1).astype(bf16)                                             # (N, n_hid)

    # conv1_1 (plain, is_last=True): v2v(x1 @ W11 + b11) == v2v(x1) @ W11 + b11
    y1_ref[...] = jnp.dot(u1b, wt11_ref[...],
                          preferred_element_type=jnp.float32) + b11_ref[...]

    # conv5 (GIB): relu(v2v(x1 @ W5 + b5)) == relu(v2v(x1) @ W5 + b5)
    x5 = jnp.maximum(jnp.dot(u1b, wt5_ref[...],
                             preferred_element_type=jnp.float32) + b5_ref[...], 0.0)
    kl5 = gib_kl(x5, att5t_ref[...])

    # conv5_1 (plain): v2v(x5 @ W51 + b51) == v2v(x5) @ W51 + b51
    u5b = v2v(x5).astype(bf16)
    y5_ref[...] = jnp.dot(u5b, wt51_ref[...],
                          preferred_element_type=jnp.float32) + b51_ref[...]

    kl_ref[0, 0] = (kl1 + kl5) * 0.5                                       # SMEM scalar


# ----------------------------------------------------------------------------
# One-time preprocessing (hoisted out of the per-call forward; cache its result
# whenever H / params are reused across calls).
# ----------------------------------------------------------------------------
def _pad_lanes(a, lanes):
    pad = lanes - a.shape[-1]
    return jnp.pad(a, ((0, 0), (0, pad))) if pad > 0 else a


def prepare_hgib_inputs(H, params):
    n_class = params["w1_1"].shape[0]
    cpad = ((n_class + 127) // 128) * 128       # lane-dense class output width

    # Pre-fold the degree normalizers into the incidence matrix ONCE; shared by
    # all three v2v passes inside the fused kernel.  Zero-degree guard keeps
    # arbitrary hypergraphs safe (no-op for valid H).
    H = H.astype(jnp.float32)
    de = jnp.sum(H, axis=0)
    dv = jnp.sum(H, axis=1)
    dei = jnp.where(de > 0, 1.0 / jnp.maximum(de, 1.0), 0.0)
    dvi = jnp.where(dv > 0, 1.0 / jnp.maximum(dv, 1.0), 0.0)
    hv = (H * dvi[:, None]).astype(jnp.bfloat16)       # (N, E) = Dv^{-1} H
    hte = (H.T * dei[:, None]).astype(jnp.bfloat16)    # (E, N) = De^{-1} H^T

    prep = dict(
        hv=hv, hte=hte,
        wt1=params["w1"].T.astype(jnp.bfloat16),
        b1=params["b1"].reshape(1, -1).astype(jnp.float32),
        att1t=params["att1"].T.astype(jnp.bfloat16),                       # (C, heads)
        wt11=_pad_lanes(params["w1_1"].T, cpad).astype(jnp.bfloat16),
        b11=_pad_lanes(params["b1_1"].reshape(1, -1), cpad).astype(jnp.float32),
        wt5=params["w5"].T.astype(jnp.bfloat16),
        b5=params["b5"].reshape(1, -1).astype(jnp.float32),
        att5t=params["att5"].T.astype(jnp.bfloat16),
        wt51=_pad_lanes(params["w5_1"].T, cpad).astype(jnp.bfloat16),
        b51=_pad_lanes(params["b5_1"].reshape(1, -1), cpad).astype(jnp.float32),
    )
    return prep, n_class


# ----------------------------------------------------------------------------
# Forward (only casts x and launches the fused kernel).
# ----------------------------------------------------------------------------
@partial(jax.jit, static_argnames=("n_class",))
def hgib_robust_forward(x, prep, *, n_class):
    n = x.shape[0]
    heads = prep["att1t"].shape[1]
    assert n % heads == 0, "N must be divisible by heads (PyTorch .view(-1, heads, C))"
    cpad = prep["wt11"].shape[1]

    vspec = pl.BlockSpec(memory_space=pltpu.MemorySpace.VMEM)
    y1p, y5p, kl = pl.pallas_call(
        _hgib_fused_kernel,
        out_shape=(jax.ShapeDtypeStruct((n, cpad), jnp.float32),
                   jax.ShapeDtypeStruct((n, cpad), jnp.float32),
                   jax.ShapeDtypeStruct((1, 1), jnp.float32)),
        in_specs=[vspec] * 13,
        out_specs=(vspec, vspec,
                   pl.BlockSpec(memory_space=pltpu.MemorySpace.SMEM)),
    )(x.astype(jnp.bfloat16), prep["hv"], prep["hte"],
      prep["wt1"], prep["b1"], prep["att1t"], prep["wt11"], prep["b11"],
      prep["wt5"], prep["b5"], prep["att5t"], prep["wt51"], prep["b51"])

    return (y1p[:, :n_class], y5p[:, :n_class]), kl[0, 0]


# ----------------------------------------------------------------------------
# Deterministic parameter initialization (mirrors PyTorch defaults).
# ----------------------------------------------------------------------------
def _linear_init(key, in_ch, out_ch):
    stdv = 1.0 / math.sqrt(in_ch)
    kw, kb = jax.random.split(key)
    w = jax.random.uniform(kw, (out_ch, in_ch), jnp.float32, -stdv, stdv)
    b = jax.random.uniform(kb, (out_ch,), jnp.float32, -stdv, stdv)
    return w, b


def _att_init(key, heads, out_ch):
    stdv = 1.0 / math.sqrt(out_ch)
    return jax.random.uniform(key, (heads, out_ch), jnp.float32, -stdv, stdv)


def init_hgib_robust(key, in_ch, n_hid, n_class, heads):
    keys = jax.random.split(key, 6)
    w1, b1 = _linear_init(keys[0], in_ch, n_hid)
    att1 = _att_init(keys[1], heads, n_hid)
    w1_1, b1_1 = _linear_init(keys[2], n_hid, n_class)
    w5, b5 = _linear_init(keys[3], n_hid, n_hid)
    att5 = _att_init(keys[4], heads, n_hid)
    w5_1, b5_1 = _linear_init(keys[5], n_hid, n_class)
    return dict(w1=w1, b1=b1, att1=att1, w1_1=w1_1, b1_1=b1_1,
                w5=w5, b5=b5, att5=att5, w5_1=w5_1, b5_1=b5_1)


# ----------------------------------------------------------------------------
# Pure-JAX f32 reference in the ORIGINAL op order (validates both the fused
# kernel and the linearity reorder).
# ----------------------------------------------------------------------------
def _reference_forward(x, H, params):
    heads = params["att1"].shape[0]
    de = jnp.sum(H, axis=0)
    dv = jnp.sum(H, axis=1)
    dei = jnp.where(de > 0, 1.0 / jnp.maximum(de, 1.0), 0.0)
    dvi = jnp.where(dv > 0, 1.0 / jnp.maximum(dv, 1.0), 0.0)
    hv = H * dvi[:, None]
    hte = H.T * dei[:, None]

    def v2v(z):
        return hv @ (hte @ z)

    def gib(z, w, b, att):
        z1 = z @ w.T + b
        zr = jnp.maximum(v2v(z1), 0.0)
        n, c = zr.shape
        a = jnp.mean(zr.reshape(n // heads, heads, c) * att, axis=-1).reshape(-1)
        a = jnp.where(a >= 0.0, a, 0.2 * a)
        a = jnp.clip(jax.nn.sigmoid(a), 0.01, 0.99)
        kl = a * jnp.log(2.0 * a) + (1.0 - a) * jnp.log(2.0 * (1.0 - a))
        return zr, jnp.sum(kl)

    def plain(z, w, b):
        return v2v(z @ w.T + b)

    x1, kl1 = gib(x, params["w1"], params["b1"], params["att1"])
    y1 = plain(x1, params["w1_1"], params["b1_1"])
    x5, kl5 = gib(x1, params["w5"], params["b5"], params["att5"])
    y5 = plain(x5, params["w5_1"], params["b5_1"])
    return (y1, y5), (kl1 + kl5) / 2.0


# ----------------------------------------------------------------------------
if __name__ == "__main__":
    # Small, module-consistent shapes
    N = 16        # number of vertices (divisible by heads)
    E = 8         # number of hyperedges
    IN_CH = 32
    N_HID = 32
    N_CLASS = 3
    HEADS = 8

    key = jax.random.PRNGKey(0)
    k_x, k_h, k_p = jax.random.split(key, 3)

    x = jax.random.normal(k_x, (N, IN_CH), jnp.float32)

    # Deterministic incidence matrix with guaranteed nonzero vertex/edge degrees
    H = (jax.random.uniform(k_h, (N, E)) < 0.4).astype(jnp.float32)
    H = H.at[:, 0].set(1.0)   # every vertex touches edge 0
    H = H.at[0, :].set(1.0)   # every edge contains vertex 0

    params = init_hgib_robust(k_p, IN_CH, N_HID, N_CLASS, HEADS)

    # One-time preprocessing (hoisted out of the per-call forward).
    prep, n_class = prepare_hgib_inputs(H, params)

    (y1, y5), kl = hgib_robust_forward(x, prep, n_class=n_class)
    jax.block_until_ready((y1, y5, kl))

    (r1, r5), rkl = _reference_forward(x, H, params)

    assert y1.shape == (N, N_CLASS) and y5.shape == (N, N_CLASS)
    assert jnp.isfinite(y1).all() and jnp.isfinite(y5).all() and jnp.isfinite(kl)
    # loose tolerance: kernel runs bf16 MXU operands (f32 accumulation) against
    # an f32 XLA reference, plus the linearity reorder of theta/v2v.
    assert jnp.allclose(y1, r1, rtol=6e-2, atol=6e-2)
    assert jnp.allclose(y5, r5, rtol=6e-2, atol=6e-2)
    assert jnp.allclose(kl, rkl, rtol=6e-2, atol=6e-2)
    print("KERNEL_OK")
</pallas_src>

<mosaic_0001>
module attributes {stable_mosaic.version = 11 : i64} {
  func.func @_hgib_fused_kernel(%arg0: memref<16x32xbf16, #tpu.memory_space<vmem>>, %arg1: memref<16x8xbf16, #tpu.memory_space<vmem>>, %arg2: memref<8x16xbf16, #tpu.memory_space<vmem>>, %arg3: memref<32x32xbf16, #tpu.memory_space<vmem>>, %arg4: memref<1x32xf32, #tpu.memory_space<vmem>>, %arg5: memref<32x8xbf16, #tpu.memory_space<vmem>>, %arg6: memref<32x128xbf16, #tpu.memory_space<vmem>>, %arg7: memref<1x128xf32, #tpu.memory_space<vmem>>, %arg8: memref<32x32xbf16, #tpu.memory_space<vmem>>, %arg9: memref<1x32xf32, #tpu.memory_space<vmem>>, %arg10: memref<32x8xbf16, #tpu.memory_space<vmem>>, %arg11: memref<32x128xbf16, #tpu.memory_space<vmem>>, %arg12: memref<1x128xf32, #tpu.memory_space<vmem>>, %arg13: memref<16x128xf32, #tpu.memory_space<vmem>>, %arg14: memref<16x128xf32, #tpu.memory_space<vmem>>, %arg15: memref<1x1xf32, #tpu.memory_space<smem>>) attributes {dimension_semantics = [], scalar_prefetch = 0 : i64, scratch_operands = 0 : i64, tpu.core_type = #tpu.core_type<tc>} {
    %c0 = arith.constant 0 : index
    %c0_0 = arith.constant 0 : index
    %0 = vector.load %arg1[%c0, %c0_0] : memref<16x8xbf16, #tpu.memory_space<vmem>>, vector<16x8xbf16>
    %c0_1 = arith.constant 0 : index
    %c0_2 = arith.constant 0 : index
    %1 = vector.load %arg2[%c0_1, %c0_2] : memref<8x16xbf16, #tpu.memory_space<vmem>>, vector<8x16xbf16>
    %2 = tpu.iota {dimensions = array<i32: 0>} : vector<16x8xi32>
    %c7_i32 = arith.constant 7 : i32
    %3 = vector.broadcast %c7_i32 : i32 to vector<16x8xi32>
    %4 = arith.andi %2, %3 : vector<16x8xi32>
    %5 = tpu.iota {dimensions = array<i32: 1>} : vector<16x8xi32>
    %6 = arith.cmpi eq, %4, %5 : vector<16x8xi32>
    %7 = arith.extui %6 : vector<16x8xi1> to vector<16x8xi32>
    %8 = arith.sitofp %7 : vector<16x8xi32> to vector<16x8xf32>
    %c0_3 = arith.constant 0 : index
    %c0_4 = arith.constant 0 : index
    %9 = vector.load %arg0[%c0_3, %c0_4] : memref<16x32xbf16, #tpu.memory_space<vmem>>, vector<16x32xbf16>
    %c0_5 = arith.constant 0 : index
    %c0_6 = arith.constant 0 : index
    %10 = vector.load %arg3[%c0_5, %c0_6] : memref<32x32xbf16, #tpu.memory_space<vmem>>, vector<32x32xbf16>
    %cst = arith.constant dense<0.000000e+00> : vector<16x32xf32>
    %11 = tpu.matmul %9, %10, %cst {dimension_numbers = #tpu.dot_dimension_numbers<[1], [0], [0], [1], [0, 0, 1, 1], [], []>} : vector<16x32xbf16>, vector<32x32xbf16>, vector<16x32xf32> -> vector<16x32xf32>
    %c0_7 = arith.constant 0 : index
    %c0_8 = arith.constant 0 : index
    %12 = vector.load %arg4[%c0_7, %c0_8] : memref<1x32xf32, #tpu.memory_space<vmem>>, vector<1x32xf32>
    %13 = vector.broadcast %12 : vector<1x32xf32> to vector<16x32xf32>
    %14 = arith.addf %11, %13 : vector<16x32xf32>
    %15 = arith.truncf %14 : vector<16x32xf32> to vector<16x32xbf16>
    %cst_9 = arith.constant dense<0.000000e+00> : vector<8x32xf32>
    %16 = tpu.matmul %1, %15, %cst_9 {dimension_numbers = #tpu.dot_dimension_numbers<[1], [0], [0], [1], [0, 0, 1, 1], [], []>} : vector<8x16xbf16>, vector<16x32xbf16>, vector<8x32xf32> -> vector<8x32xf32>
    %17 = arith.truncf %16 : vector<8x32xf32> to vector<8x32xbf16>
    %cst_10 = arith.constant dense<0.000000e+00> : vector<16x32xf32>
    %18 = tpu.matmul %0, %17, %cst_10 {dimension_numbers = #tpu.dot_dimension_numbers<[1], [0], [0], [1], [0, 0, 1, 1], [], []>} : vector<16x8xbf16>, vector<8x32xbf16>, vector<16x32xf32> -> vector<16x32xf32>
    %cst_11 = arith.constant 0.000000e+00 : f32
    %19 = vector.broadcast %cst_11 : f32 to vector<16x32xf32>
    %20 = arith.maximumf %18, %19 : vector<16x32xf32>
    %c0_12 = arith.constant 0 : index
    %c0_13 = arith.constant 0 : index
    %21 = vector.load %arg5[%c0_12, %c0_13] : memref<32x8xbf16, #tpu.memory_space<vmem>>, vector<32x8xbf16>
    %22 = arith.truncf %20 : vector<16x32xf32> to vector<16x32xbf16>
    %cst_14 = arith.constant dense<0.000000e+00> : vector<16x8xf32>
    %23 = tpu.matmul %22, %21, %cst_14 {dimension_numbers = #tpu.dot_dimension_numbers<[1], [0], [0], [1], [0, 0, 1, 1], [], []>} : vector<16x32xbf16>, vector<32x8xbf16>, vector<16x8xf32> -> vector<16x8xf32>
    %cst_15 = arith.constant 3.125000e-02 : f32
    %24 = vector.broadcast %cst_15 : f32 to vector<16x8xf32>
    %25 = arith.mulf %23, %24 : vector<16x8xf32>
    %26 = arith.mulf %25, %8 : vector<16x8xf32>
    %cst_16 = arith.constant dense<0.000000e+00> : vector<16xf32>
    %27 = vector.multi_reduction <add>, %26, %cst_16 [1] : vector<16x8xf32> to vector<16xf32>
    %28 = vector.shape_cast %27 : vector<16xf32> to vector<16x1xf32>
    %cst_17 = arith.constant 0.000000e+00 : f32
    %29 = vector.broadcast %cst_17 : f32 to vector<16x1xf32>
    %30 = arith.cmpf oge, %28, %29 : vector<16x1xf32>
    %cst_18 = arith.constant 2.000000e-01 : f32
    %31 = vector.broadcast %cst_18 : f32 to vector<16x1xf32>
    %32 = arith.mulf %31, %28 : vector<16x1xf32>
    %33 = arith.select %30, %28, %32 : vector<16x1xi1>, vector<16x1xf32>
    %34 = arith.negf %33 : vector<16x1xf32>
    %35 = math.exp %34 : vector<16x1xf32>
    %cst_19 = arith.constant 1.000000e+00 : f32
    %36 = vector.broadcast %cst_19 : f32 to vector<16x1xf32>
    %37 = arith.addf %36, %35 : vector<16x1xf32>
    %38 = arith.divf %36, %37 : vector<16x1xf32>
    %cst_20 = arith.constant 0.00999999977 : f32
    %cst_21 = arith.constant 9.900000e-01 : f32
    %39 = vector.broadcast %cst_20 : f32 to vector<16x1xf32>
    %40 = arith.maximumf %39, %38 : vector<16x1xf32>
    %41 = vector.broadcast %cst_21 : f32 to vector<16x1xf32>
    %42 = arith.minimumf %41, %40 : vector<16x1xf32>
    %cst_22 = arith.constant 2.000000e+00 : f32
    %43 = vector.broadcast %cst_22 : f32 to vector<16x1xf32>
    %44 = arith.mulf %43, %42 : vector<16x1xf32>
    %45 = math.log %44 : vector<16x1xf32>
    %46 = arith.mulf %42, %45 : vector<16x1xf32>
    %cst_23 = arith.constant 1.000000e+00 : f32
    %47 = vector.broadcast %cst_23 : f32 to vector<16x1xf32>
    %48 = arith.subf %47, %42 : vector<16x1xf32>
    %cst_24 = arith.constant 1.000000e+00 : f32
    %49 = vector.broadcast %cst_24 : f32 to vector<16x1xf32>
    %50 = arith.subf %49, %42 : vector<16x1xf32>
    %cst_25 = arith.constant 2.000000e+00 : f32
    %51 = vector.broadcast %cst_25 : f32 to vector<16x1xf32>
    %52 = arith.mulf %51, %50 : vector<16x1xf32>
    %53 = math.log %52 : vector<16x1xf32>
    %54 = arith.mulf %48, %53 : vector<16x1xf32>
    %55 = arith.addf %46, %54 : vector<16x1xf32>
    %56 = vector.shape_cast %55 : vector<16x1xf32> to vector<1x16x1xf32>
    %cst_26 = arith.constant dense<0.000000e+00> : vector<1xf32>
    %57 = vector.multi_reduction <add>, %56, %cst_26 [1, 2] : vector<1x16x1xf32> to vector<1xf32>
    %58 = vector.shape_cast %57 : vector<1xf32> to vector<1x1x1xf32>
    %59 = vector.extract %58[0, 0, 0] : f32 from vector<1x1x1xf32>
    %60 = arith.truncf %20 : vector<16x32xf32> to vector<16x32xbf16>
    %cst_27 = arith.constant dense<0.000000e+00> : vector<8x32xf32>
    %61 = tpu.matmul %1, %60, %cst_27 {dimension_numbers = #tpu.dot_dimension_numbers<[1], [0], [0], [1], [0, 0, 1, 1], [], []>} : vector<8x16xbf16>, vector<16x32xbf16>, vector<8x32xf32> -> vector<8x32xf32>
    %62 = arith.truncf %61 : vector<8x32xf32> to vector<8x32xbf16>
    %cst_28 = arith.constant dense<0.000000e+00> : vector<16x32xf32>
    %63 = tpu.matmul %0, %62, %cst_28 {dimension_numbers = #tpu.dot_dimension_numbers<[1], [0], [0], [1], [0, 0, 1, 1], [], []>} : vector<16x8xbf16>, vector<8x32xbf16>, vector<16x32xf32> -> vector<16x32xf32>
    %64 = arith.truncf %63 : vector<16x32xf32> to vector<16x32xbf16>
    %c0_29 = arith.constant 0 : index
    %c0_30 = arith.constant 0 : index
    %65 = vector.load %arg6[%c0_29, %c0_30] : memref<32x128xbf16, #tpu.memory_space<vmem>>, vector<32x128xbf16>
    %cst_31 = arith.constant dense<0.000000e+00> : vector<16x128xf32>
    %66 = tpu.matmul %64, %65, %cst_31 {dimension_numbers = #tpu.dot_dimension_numbers<[1], [0], [0], [1], [0, 0, 1, 1], [], []>} : vector<16x32xbf16>, vector<32x128xbf16>, vector<16x128xf32> -> vector<16x128xf32>
    %c0_32 = arith.constant 0 : index
    %c0_33 = arith.constant 0 : index
    %67 = vector.load %arg7[%c0_32, %c0_33] : memref<1x128xf32, #tpu.memory_space<vmem>>, vector<1x128xf32>
    %68 = vector.broadcast %67 : vector<1x128xf32> to vector<16x128xf32>
    %69 = arith.addf %66, %68 : vector<16x128xf32>
    %c0_34 = arith.constant 0 : index
    %c0_35 = arith.constant 0 : index
    %70 = vector.load %arg13[%c0_34, %c0_35] : memref<16x128xf32, #tpu.memory_space<vmem>>, vector<16x128xf32>
    tpu.vector_store %arg13[%c0_34, %c0_35], %69 {strides = array<i32>} : memref<16x128xf32, #tpu.memory_space<vmem>>, vector<16x128xf32>,
    %c0_36 = arith.constant 0 : index
    %c0_37 = arith.constant 0 : index
    %71 = vector.load %arg8[%c0_36, %c0_37] : memref<32x32xbf16, #tpu.memory_space<vmem>>, vector<32x32xbf16>
    %cst_38 = arith.constant dense<0.000000e+00> : vector<16x32xf32>
    %72 = tpu.matmul %64, %71, %cst_38 {dimension_numbers = #tpu.dot_dimension_numbers<[1], [0], [0], [1], [0, 0, 1, 1], [], []>} : vector<16x32xbf16>, vector<32x32xbf16>, vector<16x32xf32> -> vector<16x32xf32>
    %c0_39 = arith.constant 0 : index
    %c0_40 = arith.constant 0 : index
    %73 = vector.load %arg9[%c0_39, %c0_40] : memref<1x32xf32, #tpu.memory_space<vmem>>, vector<1x32xf32>
    %74 = vector.broadcast %73 : vector<1x32xf32> to vector<16x32xf32>
    %75 = arith.addf %72, %74 : vector<16x32xf32>
    %cst_41 = arith.constant 0.000000e+00 : f32
    %76 = vector.broadcast %cst_41 : f32 to vector<16x32xf32>
    %77 = arith.maximumf %75, %76 : vector<16x32xf32>
    %c0_42 = arith.constant 0 : index
    %c0_43 = arith.constant 0 : index
    %78 = vector.load %arg10[%c0_42, %c0_43] : memref<32x8xbf16, #tpu.memory_space<vmem>>, vector<32x8xbf16>
    %79 = arith.truncf %77 : vector<16x32xf32> to vector<16x32xbf16>
    %cst_44 = arith.constant dense<0.000000e+00> : vector<16x8xf32>
    %80 = tpu.matmul %79, %78, %cst_44 {dimension_numbers = #tpu.dot_dimension_numbers<[1], [0], [0], [1], [0, 0, 1, 1], [], []>} : vector<16x32xbf16>, vector<32x8xbf16>, vector<16x8xf32> -> vector<16x8xf32>
    %cst_45 = arith.constant 3.125000e-02 : f32
    %81 = vector.broadcast %cst_45 : f32 to vector<16x8xf32>
    %82 = arith.mulf %80, %81 : vector<16x8xf32>
    %83 = arith.mulf %82, %8 : vector<16x8xf32>
    %cst_46 = arith.constant dense<0.000000e+00> : vector<16xf32>
    %84 = vector.multi_reduction <add>, %83, %cst_46 [1] : vector<16x8xf32> to vector<16xf32>
    %85 = vector.shape_cast %84 : vector<16xf32> to vector<16x1xf32>
    %cst_47 = arith.constant 0.000000e+00 : f32
    %86 = vector.broadcast %cst_47 : f32 to vector<16x1xf32>
    %87 = arith.cmpf oge, %85, %86 : vector<16x1xf32>
    %cst_48 = arith.constant 2.000000e-01 : f32
    %88 = vector.broadcast %cst_48 : f32 to vector<16x1xf32>
    %89 = arith.mulf %88, %85 : vector<16x1xf32>
    %90 = arith.select %87, %85, %89 : vector<16x1xi1>, vector<16x1xf32>
    %91 = arith.negf %90 : vector<16x1xf32>
    %92 = math.exp %91 : vector<16x1xf32>
    %cst_49 = arith.constant 1.000000e+00 : f32
    %93 = vector.broadcast %cst_49 : f32 to vector<16x1xf32>
    %94 = arith.addf %93, %92 : vector<16x1xf32>
    %95 = arith.divf %93, %94 : vector<16x1xf32>
    %cst_50 = arith.constant 0.00999999977 : f32
    %cst_51 = arith.constant 9.900000e-01 : f32
    %96 = vector.broadcast %cst_50 : f32 to vector<16x1xf32>
    %97 = arith.maximumf %96, %95 : vector<16x1xf32>
    %98 = vector.broadcast %cst_51 : f32 to vector<16x1xf32>
    %99 = arith.minimumf %98, %97 : vector<16x1xf32>
    %cst_52 = arith.constant 2.000000e+00 : f32
    %100 = vector.broadcast %cst_52 : f32 to vector<16x1xf32>
    %101 = arith.mulf %100, %99 : vector<16x1xf32>
    %102 = math.log %101 : vector<16x1xf32>
    %103 = arith.mulf %99, %102 : vector<16x1xf32>
    %cst_53 = arith.constant 1.000000e+00 : f32
    %104 = vector.broadcast %cst_53 : f32 to vector<16x1xf32>
    %105 = arith.subf %104, %99 : vector<16x1xf32>
    %cst_54 = arith.constant 1.000000e+00 : f32
    %106 = vector.broadcast %cst_54 : f32 to vector<16x1xf32>
    %107 = arith.subf %106, %99 : vector<16x1xf32>
    %cst_55 = arith.constant 2.000000e+00 : f32
    %108 = vector.broadcast %cst_55 : f32 to vector<16x1xf32>
    %109 = arith.mulf %108, %107 : vector<16x1xf32>
    %110 = math.log %109 : vector<16x1xf32>
    %111 = arith.mulf %105, %110 : vector<16x1xf32>
    %112 = arith.addf %103, %111 : vector<16x1xf32>
    %113 = vector.shape_cast %112 : vector<16x1xf32> to vector<1x16x1xf32>
    %cst_56 = arith.constant dense<0.000000e+00> : vector<1xf32>
    %114 = vector.multi_reduction <add>, %113, %cst_56 [1, 2] : vector<1x16x1xf32> to vector<1xf32>
    %115 = vector.shape_cast %114 : vector<1xf32> to vector<1x1x1xf32>
    %116 = vector.extract %115[0, 0, 0] : f32 from vector<1x1x1xf32>
    %117 = arith.truncf %77 : vector<16x32xf32> to vector<16x32xbf16>
    %cst_57 = arith.constant dense<0.000000e+00> : vector<8x32xf32>
    %118 = tpu.matmul %1, %117, %cst_57 {dimension_numbers = #tpu.dot_dimension_numbers<[1], [0], [0], [1], [0, 0, 1, 1], [], []>} : vector<8x16xbf16>, vector<16x32xbf16>, vector<8x32xf32> -> vector<8x32xf32>
    %119 = arith.truncf %118 : vector<8x32xf32> to vector<8x32xbf16>
    %cst_58 = arith.constant dense<0.000000e+00> : vector<16x32xf32>
    %120 = tpu.matmul %0, %119, %cst_58 {dimension_numbers = #tpu.dot_dimension_numbers<[1], [0], [0], [1], [0, 0, 1, 1], [], []>} : vector<16x8xbf16>, vector<8x32xbf16>, vector<16x32xf32> -> vector<16x32xf32>
    %121 = arith.truncf %120 : vector<16x32xf32> to vector<16x32xbf16>
    %c0_59 = arith.constant 0 : index
    %c0_60 = arith.constant 0 : index
    %122 = vector.load %arg11[%c0_59, %c0_60] : memref<32x128xbf16, #tpu.memory_space<vmem>>, vector<32x128xbf16>
    %cst_61 = arith.constant dense<0.000000e+00> : vector<16x128xf32>
    %123 = tpu.matmul %121, %122, %cst_61 {dimension_numbers = #tpu.dot_dimension_numbers<[1], [0], [0], [1], [0, 0, 1, 1], [], []>} : vector<16x32xbf16>, vector<32x128xbf16>, vector<16x128xf32> -> vector<16x128xf32>
    %c0_62 = arith.constant 0 : index
    %c0_63 = arith.constant 0 : index
    %124 = vector.load %arg12[%c0_62, %c0_63] : memref<1x128xf32, #tpu.memory_space<vmem>>, vector<1x128xf32>
    %125 = vector.broadcast %124 : vector<1x128xf32> to vector<16x128xf32>
    %126 = arith.addf %123, %125 : vector<16x128xf32>
    %c0_64 = arith.constant 0 : index
    %c0_65 = arith.constant 0 : index
    %127 = vector.load %arg14[%c0_64, %c0_65] : memref<16x128xf32, #tpu.memory_space<vmem>>, vector<16x128xf32>
    tpu.vector_store %arg14[%c0_64, %c0_65], %126 {strides = array<i32>} : memref<16x128xf32, #tpu.memory_space<vmem>>, vector<16x128xf32>,
    %128 = arith.addf %59, %116 : f32
    %cst_66 = arith.constant 5.000000e-01 : f32
    %129 = arith.mulf %128, %cst_66 : f32
    %c0_67 = arith.constant 0 : index
    %c0_68 = arith.constant 0 : index
    %130 = memref.load %arg15[%c0_67, %c0_68] : memref<1x1xf32, #tpu.memory_space<smem>>
    memref.store %129, %arg15[%c0_67, %c0_68] : memref<1x1xf32, #tpu.memory_space<smem>>
    return
  }
}

</mosaic_0001>

<llo_original>
// kernel: hgib_robust_forward.1
$region0: #{hgib_robust_forward.1}
  #allocation0 [shape = 'u32[]', space=smem, size = 0x4, offset = 0x4, fixed_abs, tag = 'smem constant byte address 0x4 - core index']
  #allocation1 [shape = 'u32[144,128]{1,0:T(1,128)}', space=vmem, size = 0x12000, scoped, tag = 'internal scratch']
  %s0 = inlined_call_operand.vmem [shape: bf16[16,32], index: 0, kind: input, shape index: {}]
  %s1 = inlined_call_operand.vmem [shape: bf16[16,8], index: 1, kind: input, shape index: {}]
  %s2 = inlined_call_operand.vmem [shape: bf16[8,16], index: 2, kind: input, shape index: {}]
  %s3 = inlined_call_operand.vmem [shape: bf16[32,32], index: 3, kind: input, shape index: {}]
  %s4 = inlined_call_operand.vmem [shape: f32[1,32], index: 4, kind: input, shape index: {}]
  %s5 = inlined_call_operand.vmem [shape: bf16[32,8], index: 5, kind: input, shape index: {}]
  %s6 = inlined_call_operand.vmem [shape: bf16[32,128], index: 6, kind: input, shape index: {}]
  %s7 = inlined_call_operand.vmem [shape: f32[1,128], index: 7, kind: input, shape index: {}]
  %s8 = inlined_call_operand.vmem [shape: bf16[32,32], index: 8, kind: input, shape index: {}]
  %s9 = inlined_call_operand.vmem [shape: f32[1,32], index: 9, kind: input, shape index: {}]
  %s10 = inlined_call_operand.vmem [shape: bf16[32,8], index: 10, kind: input, shape index: {}]
  %s11 = inlined_call_operand.vmem [shape: bf16[32,128], index: 11, kind: input, shape index: {}]
  %s12 = inlined_call_operand.vmem [shape: f32[1,128], index: 12, kind: input, shape index: {}]
  %s13 = inlined_call_operand.vmem [shape: f32[16,128], index: 13, kind: output, shape index: {0}]
  %s14 = inlined_call_operand.vmem [shape: f32[16,128], index: 14, kind: output, shape index: {1}]
  %s15 = inlined_call_operand.hbm [shape: f32[1,1], index: 15, kind: output, shape index: {2}]
  %16 = xla_tuple %s13, %s14, %s15
  %s17 = sld [smem:[#allocation0]]
  $region78: #{hgib_robust_forward.1} parent=0
    _
  %s19 = ssub.s32 1, %s17
  %s20 = scalar_select 0, %s19, %s17
  $region1: #{hgib_robust_forward.1} parent=0
    #allocation2 [shape = 'u8[512]{0}', space=smem, size = 0x200, scoped, tag = 'output window, operand 2, single buffered']
    #allocation3 [shape = 's32[1]{0}', space=sflag, size = 0x4, scoped, tag = 'scoped memory for hgib_robust_forward.1']
    %21 = vsyncpa [#allocation3], 0
    // Predicated region
    $region2: #{hgib_robust_forward.1} parent=1 // pred_check
      _
    $region3: #{hgib_robust_forward.1} parent=1 // pred_check_branch
      %23 = sbr.rel (0) target = $region5
    $region4: #{hgib_robust_forward.1} parent=1 // pred_region
      _
    $region5: #{hgib_robust_forward.1} parent=1 // pred_fallthru
      _
    // Predicated region
    $region6: #{hgib_robust_forward.1} parent=1 // pred_check
      _
    $region7: #{hgib_robust_forward.1} parent=1 // pred_check_branch
      %25 = sbr.rel (0) target = $region9
    $region8: #{hgib_robust_forward.1} parent=1 // pred_region
      _
    $region9: #{hgib_robust_forward.1} parent=1 // pred_fallthru
      _
    // Predicated region
    $region10: #{hgib_robust_forward.1} parent=1 // pred_check
      _
    $region11: #{hgib_robust_forward.1} parent=1 // pred_check_branch
      %27 = sbr.rel (0) target = $region13
    $region12: #{hgib_robust_forward.1} parent=1 // pred_region
      _
    $region13: #{hgib_robust_forward.1} parent=1 // pred_fallthru
      _
    // Predicated region
    $region14: #{hgib_robust_forward.1} parent=1 // pred_check
      _
    $region15: #{hgib_robust_forward.1} parent=1 // pred_check_branch
      %29 = sbr.rel (0) target = $region17
    $region16: #{hgib_robust_forward.1} parent=1 // pred_region
      _
    $region17: #{hgib_robust_forward.1} parent=1 // pred_fallthru
      _
    // Predicated region
    $region18: #{hgib_robust_forward.1} parent=1 // pred_check
      _
    $region19: #{hgib_robust_forward.1} parent=1 // pred_check_branch
      %31 = sbr.rel (0) target = $region21
    $region20: #{hgib_robust_forward.1} parent=1 // pred_region
      _
    $region21: #{hgib_robust_forward.1} parent=1 // pred_fallthru
      _
    // Predicated region
    $region22: #{hgib_robust_forward.1} parent=1 // pred_check
      _
    $region23: #{hgib_robust_forward.1} parent=1 // pred_check_branch
      %33 = sbr.rel (0) target = $region25
    $region24: #{hgib_robust_forward.1} parent=1 // pred_region
      _
    $region25: #{hgib_robust_forward.1} parent=1 // pred_fallthru
      _
    // Predicated region
    $region26: #{hgib_robust_forward.1} parent=1 // pred_check
      _
    $region27: #{hgib_robust_forward.1} parent=1 // pred_check_branch
      %35 = sbr.rel (0) target = $region29
    $region28: #{hgib_robust_forward.1} parent=1 // pred_region
      _
    $region29: #{hgib_robust_forward.1} parent=1 // pred_fallthru
      _
    // Predicated region
    $region30: #{hgib_robust_forward.1} parent=1 // pred_check
      _
    $region31: #{hgib_robust_forward.1} parent=1 // pred_check_branch
      %37 = sbr.rel (0) target = $region33
    $region32: #{hgib_robust_forward.1} parent=1 // pred_region
      _
    $region33: #{hgib_robust_forward.1} parent=1 // pred_fallthru
      _
    // Predicated region
    $region34: #{hgib_robust_forward.1} parent=1 // pred_check
      _
    $region35: #{hgib_robust_forward.1} parent=1 // pred_check_branch
      %39 = sbr.rel (0) target = $region37
    $region36: #{hgib_robust_forward.1} parent=1 // pred_region
      _
    $region37: #{hgib_robust_forward.1} parent=1 // pred_fallthru
      _
    // Predicated region
    $region38: #{hgib_robust_forward.1} parent=1 // pred_check
      _
    $region39: #{hgib_robust_forward.1} parent=1 // pred_check_branch
      %41 = sbr.rel (0) target = $region41
    $region40: #{hgib_robust_forward.1} parent=1 // pred_region
      _
    $region41: #{hgib_robust_forward.1} parent=1 // pred_fallthru
      _
    // Predicated region
    $region42: #{hgib_robust_forward.1} parent=1 // pred_check
      _
    $region43: #{hgib_robust_forward.1} parent=1 // pred_check_branch
      %43 = sbr.rel (0) target = $region45
    $region44: #{hgib_robust_forward.1} parent=1 // pred_region
      _
    $region45: #{hgib_robust_forward.1} parent=1 // pred_fallthru
      _
    // Predicated region
    $region46: #{hgib_robust_forward.1} parent=1 // pred_check
      _
    $region47: #{hgib_robust_forward.1} parent=1 // pred_check_branch
      %45 = sbr.rel (0) target = $region49
    $region48: #{hgib_robust_forward.1} parent=1 // pred_region
      _
    $region49: #{hgib_robust_forward.1} parent=1 // pred_fallthru
      _
    // Predicated region
    $region50: #{hgib_robust_forward.1} parent=1 // pred_check
      _
    $region51: #{hgib_robust_forward.1} parent=1 // pred_check_branch
      %47 = sbr.rel (0) target = $region53
    $region52: #{hgib_robust_forward.1} parent=1 // pred_region
      _
    $region53: #{hgib_robust_forward.1} parent=1 // pred_fallthru
      _
    %v49 = vld [vmem:[%s1] sm:$0xf]
    %v50 = vld [vmem:[%s1 + $0x4] sm:$0xf]
    %v51 = vld [vmem:[%s2] sm:$0xf]
    %v52 = vlaneseq
    %v53 = vshrl.u32 %v52, 7
    %v54 = vadd.s32 %v53, 8
    %v55 = vand.u32 %v53, 7
    %v56 = vand.u32 %v54, 7
    %v57 = vlaneseq
    %v58 = vand.u32 %v57, 127
    %vm59 = vcmp.eq.s32.totalorder %v55, %v58
    %vm60 = vcmp.eq.s32.totalorder %v56, %v58
    %v61 = vsel %vm59, 1, 0
    %v62 = vsel %vm60, 1, 0
    %v63 = vcvt.s32.f32 %v61
    %v64 = vcvt.s32.f32 %v62
    %v65 = vld [vmem:[%s0] sm:$0xf]
    %v66 = vld [vmem:[%s0 + $0x4] sm:$0xf]
    %v67 = vld [vmem:[%s3] sm:$0xf]
    %v68 = vld [vmem:[%s3 + $0x4] sm:$0xf]
    %v69 = vld [vmem:[%s3 + $0x8] sm:$0xf]
    %v70 = vld [vmem:[%s3 + $0xc] sm:$0xf]
    %v71 = vld [vmem:[%s4] sm:$0x1]
    %v73 = vlaneseq
    %v74 = vshrl.u32 %v73, 7
    %v75 = vsub.s32 0, %v74
    %v76 = vrot.slane %v71, %v75
    %v80 = vunpack.c.l.b16 %v65
    %v81 = vunpack.c.l.b16 %v66
    %v82 = vpack.c.b16 %v81, %v80
    %v87 = vunpack.c.l.b16 %v67
    %v88 = vunpack.c.l.b16 %v68
    %v89 = vunpack.c.l.b16 %v69
    %v90 = vunpack.c.l.b16 %v70
    %v91 = vpack.c.b16 %v88, %v87
    %v92 = vpack.c.b16 %v90, %v89
    %vm95 = vcmask 261120
    %v97 = vsel %vm95, %v82, 0
    %99 = vmatprep.subr.bf16.mxu0 0
    %100 = vmatpush1.bf16.msra.mxu0 %v91
    %101 = vmatprep.subr.bf16.mxu0 0
    %102 = vmatpush1.bf16.msra.mxu0 %v92
    %103 = vmatprep.subr.bf16.mxu0 0
    %104 = vmatpush1.bf16.msra.mxu0 0
    %105 = vmatprep.subr.bf16.mxu0 0
    %106 = vmatpush1.bf16.msra.mxu0 0
    %107 = vmatprep.subr.bf16.mxu0 0
    %108 = vmatpush1.bf16.msra.mxu0 0
    %109 = vmatprep.subr.bf16.mxu0 0
    %110 = vmatpush1.bf16.msra.mxu0 0
    %111 = vmatprep.subr.bf16.mxu0 0
    %112 = vmatpush1.bf16.msra.mxu0 0
    %113 = vmatprep.subr.bf16.mxu0 0
    %114 = vmatpush1.bf16.msra.mxu0 0
    %115 = vmatprep.subr.bf16.mxu0 0
    %116 = vmatpush1.bf16.msra.mxu0 0
    %117 = vmatprep.subr.bf16.mxu0 0
    %118 = vmatpush1.bf16.msra.mxu0 0
    %119 = vmatprep.subr.bf16.mxu0 0
    %120 = vmatpush1.bf16.msra.mxu0 0
    %121 = vmatprep.subr.bf16.mxu0 0
    %122 = vmatpush1.bf16.msra.mxu0 0
    %123 = vmatprep.subr.bf16.mxu0 0
    %124 = vmatpush1.bf16.msra.mxu0 0
    %125 = vmatprep.subr.bf16.mxu0 0
    %126 = vmatpush1.bf16.msra.mxu0 0
    %127 = vmatprep.subr.bf16.mxu0 0
    %128 = vmatpush1.bf16.msra.mxu0 0
    %129 = vmatprep.subr.bf16.mxu0 0
    %130 = vmatpush1.bf16.msra.mxu0 0
    %131 = vmatprep.mubr.bf16.mxu0 0
    %132 = vmatmul.mubr.bf16.gmra.mrb[0].mxu0 %v97
    %v133 = vpop.f32.mrb[0].mxu0
    %v134 = vadd.f32 %v76, %v133
    %v135 = vpop.f32.mrb[0].mxu0
    %v136 = vpop.f32.mrb[0].mxu0
    %v137 = vadd.f32 %v76, %v136
    %v138 = vpop.f32.mrb[0].mxu0
    %139 = vdwg.mxu0
    %v140 = vpack.c.bf16 %v137, %v134
    %vm141 = vcmask 130048
    %v143 = vsel %vm141, %v51, 0
    %145 = vmatprep.subr.bf16.mxu0 0
    %146 = vmatpush1.bf16.msra.mxu0 %v140
    %147 = vmatprep.subr.bf16.mxu0 0
    %148 = vmatpush1.bf16.msra.mxu0 0
    %149 = vmatprep.subr.bf16.mxu0 0
    %150 = vmatpush1.bf16.msra.mxu0 0
    %151 = vmatprep.subr.bf16.mxu0 0
    %152 = vmatpush1.bf16.msra.mxu0 0
    %153 = vmatprep.subr.bf16.mxu0 0
    %154 = vmatpush1.bf16.msra.mxu0 0
    %155 = vmatprep.subr.bf16.mxu0 0
    %156 = vmatpush1.bf16.msra.mxu0 0
    %157 = vmatprep.subr.bf16.mxu0 0
    %158 = vmatpush1.bf16.msra.mxu0 0
    %159 = vmatprep.subr.bf16.mxu0 0
    %160 = vmatpush1.bf16.msra.mxu0 0
    %161 = vmatprep.subr.bf16.mxu0 0
    %162 = vmatpush1.bf16.msra.mxu0 0
    %163 = vmatprep.subr.bf16.mxu0 0
    %164 = vmatpush1.bf16.msra.mxu0 0
    %165 = vmatprep.subr.bf16.mxu0 0
    %166 = vmatpush1.bf16.msra.mxu0 0
    %167 = vmatprep.subr.bf16.mxu0 0
    %168 = vmatpush1.bf16.msra.mxu0 0
    %169 = vmatprep.subr.bf16.mxu0 0
    %170 = vmatpush1.bf16.msra.mxu0 0
    %171 = vmatprep.subr.bf16.mxu0 0
    %172 = vmatpush1.bf16.msra.mxu0 0
    %173 = vmatprep.subr.bf16.mxu0 0
    %174 = vmatpush1.bf16.msra.mxu0 0
    %175 = vmatprep.subr.bf16.mxu0 0
    %176 = vmatpush1.bf16.msra.mxu0 0
    %177 = vmatprep.mubr.bf16.mxu0 0
    %178 = vmatmul.mubr.bf16.gmra.mrb[0].mxu0 %v143
    %v179 = vpop.f32.mrb[0].mxu0
    %v180 = vadd.f32 0.0, %v179
    %v181 = vpop.f32.mrb[0].mxu0
    %v182 = vpop.f32.mrb[0].mxu0
    %v183 = vpop.f32.mrb[0].mxu0
    %184 = vdwg.mxu0
    %v185 = vpack.c.bf16 %v180, %v180
    %v188 = vunpack.c.l.b16 %v49
    %v189 = vunpack.c.l.b16 %v50
    %v190 = vpack.c.b16 %v189, %v188
    %vm191 = vcmask 64512
    %v193 = vsel %vm191, %v190, 0
    %vm195 = vcmask 1043456
    %v197 = vsel %vm195, %v185, 0
    %199 = vmatprep.subr.bf16.mxu0 0
    %200 = vmatpush1.bf16.msra.mxu0 %v197
    %201 = vmatprep.subr.bf16.mxu0 0
    %202 = vmatpush1.bf16.msra.mxu0 0
    %203 = vmatprep.subr.bf16.mxu0 0
    %204 = vmatpush1.bf16.msra.mxu0 0
    %205 = vmatprep.subr.bf16.mxu0 0
    %206 = vmatpush1.bf16.msra.mxu0 0
    %207 = vmatprep.subr.bf16.mxu0 0
    %208 = vmatpush1.bf16.msra.mxu0 0
    %209 = vmatprep.subr.bf16.mxu0 0
    %210 = vmatpush1.bf16.msra.mxu0 0
    %211 = vmatprep.subr.bf16.mxu0 0
    %212 = vmatpush1.bf16.msra.mxu0 0
    %213 = vmatprep.subr.bf16.mxu0 0
    %214 = vmatpush1.bf16.msra.mxu0 0
    %215 = vmatprep.subr.bf16.mxu0 0
    %216 = vmatpush1.bf16.msra.mxu0 0
    %217 = vmatprep.subr.bf16.mxu0 0
    %218 = vmatpush1.bf16.msra.mxu0 0
    %219 = vmatprep.subr.bf16.mxu0 0
    %220 = vmatpush1.bf16.msra.mxu0 0
    %221 = vmatprep.subr.bf16.mxu0 0
    %222 = vmatpush1.bf16.msra.mxu0 0
    %223 = vmatprep.subr.bf16.mxu0 0
    %224 = vmatpush1.bf16.msra.mxu0 0
    %225 = vmatprep.subr.bf16.mxu0 0
    %226 = vmatpush1.bf16.msra.mxu0 0
    %227 = vmatprep.subr.bf16.mxu0 0
    %228 = vmatpush1.bf16.msra.mxu0 0
    %229 = vmatprep.subr.bf16.mxu0 0
    %230 = vmatpush1.bf16.msra.mxu0 0
    %231 = vmatprep.mubr.bf16.mxu0 0
    %232 = vmatmul.mubr.bf16.gmra.mrb[0].mxu0 %v193
    %v233 = vpop.f32.mrb[0].mxu0
    %v234 = vadd.f32 0.0, %v233
    %v235 = vpop.f32.mrb[0].mxu0
    %v236 = vpop.f32.mrb[0].mxu0
    %v237 = vadd.f32 0.0, %v236
    %v238 = vpop.f32.mrb[0].mxu0
    %239 = vdwg.mxu0
    %v240 = vmax.f32 %v234, 0.0
    %v241 = vmax.f32 %v237, 0.0
    %v242 = vld [vmem:[%s5] sm:$0xf]
    %v243 = vld [vmem:[%s5 + $0x4] sm:$0xf]
    %v244 = vld [vmem:[%s5 + $0x8] sm:$0xf]
    %v245 = vld [vmem:[%s5 + $0xc] sm:$0xf]
    %v246 = vpack.c.bf16 %v241, %v240
    %v251 = vunpack.c.l.b16 %v242
    %v252 = vunpack.c.l.b16 %v243
    %v253 = vunpack.c.l.b16 %v244
    %v254 = vunpack.c.l.b16 %v245
    %v255 = vpack.c.b16 %v252, %v251
    %v256 = vpack.c.b16 %v254, %v253
    %v260 = vsel %vm95, %v246, 0
    %262 = vmatprep.subr.bf16.mxu0 0
    %263 = vmatpush1.bf16.msra.mxu0 %v255
    %264 = vmatprep.subr.bf16.mxu0 0
    %265 = vmatpush1.bf16.msra.mxu0 %v256
    %266 = vmatprep.subr.bf16.mxu0 0
    %267 = vmatpush1.bf16.msra.mxu0 0
    %268 = vmatprep.subr.bf16.mxu0 0
    %269 = vmatpush1.bf16.msra.mxu0 0
    %270 = vmatprep.subr.bf16.mxu0 0
    %271 = vmatpush1.bf16.msra.mxu0 0
    %272 = vmatprep.subr.bf16.mxu0 0
    %273 = vmatpush1.bf16.msra.mxu0 0
    %274 = vmatprep.subr.bf16.mxu0 0
    %275 = vmatpush1.bf16.msra.mxu0 0
    %276 = vmatprep.subr.bf16.mxu0 0
    %277 = vmatpush1.bf16.msra.mxu0 0
    %278 = vmatprep.subr.bf16.mxu0 0
    %279 = vmatpush1.bf16.msra.mxu0 0
    %280 = vmatprep.subr.bf16.mxu0 0
    %281 = vmatpush1.bf16.msra.mxu0 0
    %282 = vmatprep.subr.bf16.mxu0 0
    %283 = vmatpush1.bf16.msra.mxu0 0
    %284 = vmatprep.subr.bf16.mxu0 0
    %285 = vmatpush1.bf16.msra.mxu0 0
    %286 = vmatprep.subr.bf16.mxu0 0
    %287 = vmatpush1.bf16.msra.mxu0 0
    %288 = vmatprep.subr.bf16.mxu0 0
    %289 = vmatpush1.bf16.msra.mxu0 0
    %290 = vmatprep.subr.bf16.mxu0 0
    %291 = vmatpush1.bf16.msra.mxu0 0
    %292 = vmatprep.subr.bf16.mxu0 0
    %293 = vmatpush1.bf16.msra.mxu0 0
    %294 = vmatprep.mubr.bf16.mxu0 0
    %295 = vmatmul.mubr.bf16.gmra.mrb[0].mxu0 %v260
    %v296 = vpop.f32.mrb[0].mxu0
    %v297 = vadd.f32 0.0, %v296
    %v298 = vpop.f32.mrb[0].mxu0
    %v299 = vpop.f32.mrb[0].mxu0
    %v300 = vadd.f32 0.0, %v299
    %v301 = vpop.f32.mrb[0].mxu0
    %302 = vdwg.mxu0
    %v303 = vmul.f32 %v297, 0.03125
    %v304 = vmul.f32 %v300, 0.03125
    %v305 = vmul.f32 %v303, %v63
    %v306 = vmul.f32 %v304, %v64
    %v307 = vsel %vm191, %v305, 0.0
    %308 = vadd.xlane.f32.xlu0 %v307
    %v309 = vpop.xlane.xlu0 %308
    %v310 = vsel %vm191, %v306, 0.0
    %311 = vadd.xlane.f32.xlu0 %v310
    %v312 = vpop.xlane.xlu0 %311
    %vm313 = vcmp.ge.f32.partialorder %v309, 0.0
    %vm314 = vcmp.ge.f32.partialorder %v312, 0.0
    %v315 = vmul.f32 %v309, 0.2
    %v316 = vmul.f32 %v312, 0.2
    %v317 = vsel %vm313, %v309, %v315
    %v318 = vsel %vm314, %v312, %v316
    %v319 = vxor.u32 %v317, 2147483648
    %v320 = vxor.u32 %v318, 2147483648
    %v321 = vmul.f32 %v319, 1.442695
    %v322 = vpow.pop %v321
    %v323 = vmul.f32 %v320, 1.442695
    %v324 = vpow.pop %v323
    %v325 = vadd.f32 %v322, 1.0
    %v326 = vadd.f32 %v324, 1.0
    %v327 = vrcp.pop %v325
    %v328 = vmul.f32 1.0, %v327
    %v329 = vrcp.pop %v326
    %v330 = vmul.f32 1.0, %v329
    %v331 = vmax.f32 %v328, 0.01
    %v332 = vmax.f32 %v330, 0.01
    %v333 = vmin.f32 %v331, 0.99
    %v334 = vmin.f32 %v332, 0.99
    %v335 = vmul.f32 %v333, 2.0
    %v336 = vmul.f32 %v334, 2.0
    %v337 = vlog2.pop %v335
    %v338 = vmul.f32 %v337, 0.6931472
    %v339 = vlog2.pop %v336
    %v340 = vmul.f32 %v339, 0.6931472
    %v341 = vmul.f32 %v333, %v338
    %v342 = vmul.f32 %v334, %v340
    %v343 = vsub.f32 1.0, %v333
    %v344 = vsub.f32 1.0, %v334
    %v345 = vmul.f32 %v343, 2.0
    %v346 = vmul.f32 %v344, 2.0
    %v347 = vlog2.pop %v345
    %v348 = vmul.f32 %v347, 0.6931472
    %v349 = vlog2.pop %v346
    %v350 = vmul.f32 %v349, 0.6931472
    %v351 = vmul.f32 %v343, %v348
    %v352 = vmul.f32 %v344, %v350
    %v353 = vadd.f32 %v341, %v351
    %v354 = vadd.f32 %v342, %v352
    %vm355 = vcmask 7168
    %v356 = vsel %vm355, %v353, 0.0
    %v357 = vsel %vm355, %v354, 0.0
    %v358 = vadd.f32 %v356, %v357
    %359 = vadd.xlane.f32.xlu0 %v358
    %v360 = vpop.xlane.xlu0 %359
    %v361 = vrot.slane %v360, 4
    %v362 = vadd.f32 %v360, %v361
    %v363 = vrot.slane %v362, 2
    %v364 = vadd.f32 %v362, %v363
    %v365 = vrot.slane %v364, 1
    %v366 = vadd.f32 %v364, %v365
    %s367 = vtos %v366
    %368 = vmatprep.subr.bf16.mxu0 0
    %369 = vmatpush1.bf16.msra.mxu0 %v246
    %370 = vmatprep.subr.bf16.mxu0 0
    %371 = vmatpush1.bf16.msra.mxu0 0
    %372 = vmatprep.subr.bf16.mxu0 0
    %373 = vmatpush1.bf16.msra.mxu0 0
    %374 = vmatprep.subr.bf16.mxu0 0
    %375 = vmatpush1.bf16.msra.mxu0 0
    %376 = vmatprep.subr.bf16.mxu0 0
    %377 = vmatpush1.bf16.msra.mxu0 0
    %378 = vmatprep.subr.bf16.mxu0 0
    %379 = vmatpush1.bf16.msra.mxu0 0
    %380 = vmatprep.subr.bf16.mxu0 0
    %381 = vmatpush1.bf16.msra.mxu0 0
    %382 = vmatprep.subr.bf16.mxu0 0
    %383 = vmatpush1.bf16.msra.mxu0 0
    %384 = vmatprep.subr.bf16.mxu0 0
    %385 = vmatpush1.bf16.msra.mxu0 0
    %386 = vmatprep.subr.bf16.mxu0 0
    %387 = vmatpush1.bf16.msra.mxu0 0
    %388 = vmatprep.subr.bf16.mxu0 0
    %389 = vmatpush1.bf16.msra.mxu0 0
    %390 = vmatprep.subr.bf16.mxu0 0
    %391 = vmatpush1.bf16.msra.mxu0 0
    %392 = vmatprep.subr.bf16.mxu0 0
    %393 = vmatpush1.bf16.msra.mxu0 0
    %394 = vmatprep.subr.bf16.mxu0 0
    %395 = vmatpush1.bf16.msra.mxu0 0
    %396 = vmatprep.subr.bf16.mxu0 0
    %397 = vmatpush1.bf16.msra.mxu0 0
    %398 = vmatprep.subr.bf16.mxu0 0
    %399 = vmatpush1.bf16.msra.mxu0 0
    %400 = vmatprep.mubr.bf16.mxu0 0
    %401 = vmatmul.mubr.bf16.gmra.mrb[0].mxu0 %v143
    %v402 = vpop.f32.mrb[0].mxu0
    %v403 = vadd.f32 0.0, %v402
    %v404 = vpop.f32.mrb[0].mxu0
    %v405 = vpop.f32.mrb[0].mxu0
    %v406 = vpop.f32.mrb[0].mxu0
    %407 = vdwg.mxu0
    %v408 = vpack.c.bf16 %v403, %v403
    %v410 = vsel %vm195, %v408, 0
    %412 = vmatprep.subr.bf16.mxu0 0
    %413 = vmatpush1.bf16.msra.mxu0 %v410
    %414 = vmatprep.subr.bf16.mxu0 0
    %415 = vmatpush1.bf16.msra.mxu0 0
    %416 = vmatprep.subr.bf16.mxu0 0
    %417 = vmatpush1.bf16.msra.mxu0 0
    %418 = vmatprep.subr.bf16.mxu0 0
    %419 = vmatpush1.bf16.msra.mxu0 0
    %420 = vmatprep.subr.bf16.mxu0 0
    %421 = vmatpush1.bf16.msra.mxu0 0
    %422 = vmatprep.subr.bf16.mxu0 0
    %423 = vmatpush1.bf16.msra.mxu0 0
    %424 = vmatprep.subr.bf16.mxu0 0
    %425 = vmatpush1.bf16.msra.mxu0 0
    %426 = vmatprep.subr.bf16.mxu0 0
    %427 = vmatpush1.bf16.msra.mxu0 0
    %428 = vmatprep.subr.bf16.mxu0 0
    %429 = vmatpush1.bf16.msra.mxu0 0
    %430 = vmatprep.subr.bf16.mxu0 0
    %431 = vmatpush1.bf16.msra.mxu0 0
    %432 = vmatprep.subr.bf16.mxu0 0
    %433 = vmatpush1.bf16.msra.mxu0 0
    %434 = vmatprep.subr.bf16.mxu0 0
    %435 = vmatpush1.bf16.msra.mxu0 0
    %436 = vmatprep.subr.bf16.mxu0 0
    %437 = vmatpush1.bf16.msra.mxu0 0
    %438 = vmatprep.subr.bf16.mxu0 0
    %439 = vmatpush1.bf16.msra.mxu0 0
    %440 = vmatprep.subr.bf16.mxu0 0
    %441 = vmatpush1.bf16.msra.mxu0 0
    %442 = vmatprep.subr.bf16.mxu0 0
    %443 = vmatpush1.bf16.msra.mxu0 0
    %444 = vmatprep.mubr.bf16.mxu0 0
    %445 = vmatmul.mubr.bf16.gmra.mrb[0].mxu0 %v193
    %v446 = vpop.f32.mrb[0].mxu0
    %v447 = vadd.f32 0.0, %v446
    %v448 = vpop.f32.mrb[0].mxu0
    %v449 = vpop.f32.mrb[0].mxu0
    %v450 = vadd.f32 0.0, %v449
    %v451 = vpop.f32.mrb[0].mxu0
    %452 = vdwg.mxu0
    %v453 = vpack.c.bf16 %v450, %v447
    %v454 = vld [vmem:[%s6] sm:$0xf]
    %v455 = vld [vmem:[%s6 + $0x4] sm:$0xf]
    %v456 = vld [vmem:[%s6 + $0x8] sm:$0xf]
    %v457 = vld [vmem:[%s6 + $0xc] sm:$0xf]
    %v458 = vld [vmem:[%s7] sm:$0x1]
    %v460 = vlaneseq
    %v461 = vshrl.u32 %v460, 7
    %v462 = vsub.s32 0, %v461
    %v463 = vrot.slane %v458, %v462
    %v469 = vunpack.c.l.b16 %v454
    %v470 = vunpack.c.l.b16 %v455
    %v471 = vunpack.c.l.b16 %v456
    %v472 = vunpack.c.l.b16 %v457
    %v473 = vpack.c.b16 %v470, %v469
    %v474 = vpack.c.b16 %v472, %v471
    %v478 = vsel %vm95, %v453, 0
    %480 = vmatprep.subr.bf16.mxu0 0
    %481 = vmatpush1.bf16.msra.mxu0 %v473
    %482 = vmatprep.subr.bf16.mxu0 0
    %483 = vmatpush1.bf16.msra.mxu0 %v474
    %484 = vmatprep.subr.bf16.mxu0 0
    %485 = vmatpush1.bf16.msra.mxu0 0
    %486 = vmatprep.subr.bf16.mxu0 0
    %487 = vmatpush1.bf16.msra.mxu0 0
    %488 = vmatprep.subr.bf16.mxu0 0
    %489 = vmatpush1.bf16.msra.mxu0 0
    %490 = vmatprep.subr.bf16.mxu0 0
    %491 = vmatpush1.bf16.msra.mxu0 0
    %492 = vmatprep.subr.bf16.mxu0 0
    %493 = vmatpush1.bf16.msra.mxu0 0
    %494 = vmatprep.subr.bf16.mxu0 0
    %495 = vmatpush1.bf16.msra.mxu0 0
    %496 = vmatprep.subr.bf16.mxu0 0
    %497 = vmatpush1.bf16.msra.mxu0 0
    %498 = vmatprep.subr.bf16.mxu0 0
    %499 = vmatpush1.bf16.msra.mxu0 0
    %500 = vmatprep.subr.bf16.mxu0 0
    %501 = vmatpush1.bf16.msra.mxu0 0
    %502 = vmatprep.subr.bf16.mxu0 0
    %503 = vmatpush1.bf16.msra.mxu0 0
    %504 = vmatprep.subr.bf16.mxu0 0
    %505 = vmatpush1.bf16.msra.mxu0 0
    %506 = vmatprep.subr.bf16.mxu0 0
    %507 = vmatpush1.bf16.msra.mxu0 0
    %508 = vmatprep.subr.bf16.mxu0 0
    %509 = vmatpush1.bf16.msra.mxu0 0
    %510 = vmatprep.subr.bf16.mxu0 0
    %511 = vmatpush1.bf16.msra.mxu0 0
    %512 = vmatprep.mubr.bf16.mxu0 0
    %513 = vmatmul.mubr.bf16.gmra.mrb[0].mxu0 %v478
    %v514 = vpop.f32.mrb[0].mxu0
    %v515 = vadd.f32 %v463, %v514
    %v516 = vpop.f32.mrb[0].mxu0
    %v517 = vpop.f32.mrb[0].mxu0
    %v518 = vadd.f32 %v463, %v517
    %v519 = vpop.f32.mrb[0].mxu0
    %520 = vdwg.mxu0
    %521 = vst [vmem:[%s13] sm:$0xff] %v515
    %522 = vst [vmem:[%s13 + $0x8] sm:$0xff] %v518
    %v523 = vld [vmem:[%s8] sm:$0xf]
    %v524 = vld [vmem:[%s8 + $0x4] sm:$0xf]
    %v525 = vld [vmem:[%s8 + $0x8] sm:$0xf]
    %v526 = vld [vmem:[%s8 + $0xc] sm:$0xf]
    %v527 = vld [vmem:[%s9] sm:$0x1]
    %v529 = vlaneseq
    %v530 = vshrl.u32 %v529, 7
    %v531 = vsub.s32 0, %v530
    %v532 = vrot.slane %v527, %v531
    %v538 = vunpack.c.l.b16 %v523
    %v539 = vunpack.c.l.b16 %v524
    %v540 = vunpack.c.l.b16 %v525
    %v541 = vunpack.c.l.b16 %v526
    %v542 = vpack.c.b16 %v539, %v538
    %v543 = vpack.c.b16 %v541, %v540
    %546 = vmatprep.subr.bf16.mxu0 0
    %547 = vmatpush1.bf16.msra.mxu0 %v542
    %548 = vmatprep.subr.bf16.mxu0 0
    %549 = vmatpush1.bf16.msra.mxu0 %v543
    %550 = vmatprep.subr.bf16.mxu0 0
    %551 = vmatpush1.bf16.msra.mxu0 0
    %552 = vmatprep.subr.bf16.mxu0 0
    %553 = vmatpush1.bf16.msra.mxu0 0
    %554 = vmatprep.subr.bf16.mxu0 0
    %555 = vmatpush1.bf16.msra.mxu0 0
    %556 = vmatprep.subr.bf16.mxu0 0
    %557 = vmatpush1.bf16.msra.mxu0 0
    %558 = vmatprep.subr.bf16.mxu0 0
    %559 = vmatpush1.bf16.msra.mxu0 0
    %560 = vmatprep.subr.bf16.mxu0 0
    %561 = vmatpush1.bf16.msra.mxu0 0
    %562 = vmatprep.subr.bf16.mxu0 0
    %563 = vmatpush1.bf16.msra.mxu0 0
    %564 = vmatprep.subr.bf16.mxu0 0
    %565 = vmatpush1.bf16.msra.mxu0 0
    %566 = vmatprep.subr.bf16.mxu0 0
    %567 = vmatpush1.bf16.msra.mxu0 0
    %568 = vmatprep.subr.bf16.mxu0 0
    %569 = vmatpush1.bf16.msra.mxu0 0
    %570 = vmatprep.subr.bf16.mxu0 0
    %571 = vmatpush1.bf16.msra.mxu0 0
    %572 = vmatprep.subr.bf16.mxu0 0
    %573 = vmatpush1.bf16.msra.mxu0 0
    %574 = vmatprep.subr.bf16.mxu0 0
    %575 = vmatpush1.bf16.msra.mxu0 0
    %576 = vmatprep.subr.bf16.mxu0 0
    %577 = vmatpush1.bf16.msra.mxu0 0
    %578 = vmatprep.mubr.bf16.mxu0 0
    %579 = vmatmul.mubr.bf16.gmra.mrb[0].mxu0 %v478
    %v580 = vpop.f32.mrb[0].mxu0
    %v581 = vadd.f32 %v532, %v580
    %v582 = vpop.f32.mrb[0].mxu0
    %v583 = vpop.f32.mrb[0].mxu0
    %v584 = vadd.f32 %v532, %v583
    %v585 = vpop.f32.mrb[0].mxu0
    %586 = vdwg.mxu0
    %v587 = vmax.f32 %v581, 0.0
    %v588 = vmax.f32 %v584, 0.0
    %v589 = vld [vmem:[%s10] sm:$0xf]
    %v590 = vld [vmem:[%s10 + $0x4] sm:$0xf]
    %v591 = vld [vmem:[%s10 + $0x8] sm:$0xf]
    %v592 = vld [vmem:[%s10 + $0xc] sm:$0xf]
    %v593 = vpack.c.bf16 %v588, %v587
    %v598 = vunpack.c.l.b16 %v589
    %v599 = vunpack.c.l.b16 %v590
    %v600 = vunpack.c.l.b16 %v591
    %v601 = vunpack.c.l.b16 %v592
    %v602 = vpack.c.b16 %v599, %v598
    %v603 = vpack.c.b16 %v601, %v600
    %v607 = vsel %vm95, %v593, 0
    %609 = vmatprep.subr.bf16.mxu0 0
    %610 = vmatpush1.bf16.msra.mxu0 %v602
    %611 = vmatprep.subr.bf16.mxu0 0
    %612 = vmatpush1.bf16.msra.mxu0 %v603
    %613 = vmatprep.subr.bf16.mxu0 0
    %614 = vmatpush1.bf16.msra.mxu0 0
    %615 = vmatprep.subr.bf16.mxu0 0
    %616 = vmatpush1.bf16.msra.mxu0 0
    %617 = vmatprep.subr.bf16.mxu0 0
    %618 = vmatpush1.bf16.msra.mxu0 0
    %619 = vmatprep.subr.bf16.mxu0 0
    %620 = vmatpush1.bf16.msra.mxu0 0
    %621 = vmatprep.subr.bf16.mxu0 0
    %622 = vmatpush1.bf16.msra.mxu0 0
    %623 = vmatprep.subr.bf16.mxu0 0
    %624 = vmatpush1.bf16.msra.mxu0 0
    %625 = vmatprep.subr.bf16.mxu0 0
    %626 = vmatpush1.bf16.msra.mxu0 0
    %627 = vmatprep.subr.bf16.mxu0 0
    %628 = vmatpush1.bf16.msra.mxu0 0
    %629 = vmatprep.subr.bf16.mxu0 0
    %630 = vmatpush1.bf16.msra.mxu0 0
    %631 = vmatprep.subr.bf16.mxu0 0
    %632 = vmatpush1.bf16.msra.mxu0 0
    %633 = vmatprep.subr.bf16.mxu0 0
    %634 = vmatpush1.bf16.msra.mxu0 0
    %635 = vmatprep.subr.bf16.mxu0 0
    %636 = vmatpush1.bf16.msra.mxu0 0
    %637 = vmatprep.subr.bf16.mxu0 0
    %638 = vmatpush1.bf16.msra.mxu0 0
    %639 = vmatprep.subr.bf16.mxu0 0
    %640 = vmatpush1.bf16.msra.mxu0 0
    %641 = vmatprep.mubr.bf16.mxu0 0
    %642 = vmatmul.mubr.bf16.gmra.mrb[0].mxu0 %v607
    %v643 = vpop.f32.mrb[0].mxu0
    %v644 = vadd.f32 0.0, %v643
    %v645 = vpop.f32.mrb[0].mxu0
    %v646 = vpop.f32.mrb[0].mxu0
    %v647 = vadd.f32 0.0, %v646
    %v648 = vpop.f32.mrb[0].mxu0
    %649 = vdwg.mxu0
    %v650 = vmul.f32 %v644, 0.03125
    %v651 = vmul.f32 %v647, 0.03125
    %v652 = vmul.f32 %v650, %v63
    %v653 = vmul.f32 %v651, %v64
    %v654 = vsel %vm191, %v652, 0.0
    %655 = vadd.xlane.f32.xlu0 %v654
    %v656 = vpop.xlane.xlu0 %655
    %v657 = vsel %vm191, %v653, 0.0
    %658 = vadd.xlane.f32.xlu0 %v657
    %v659 = vpop.xlane.xlu0 %658
    %vm660 = vcmp.ge.f32.partialorder %v656, 0.0
    %vm661 = vcmp.ge.f32.partialorder %v659, 0.0
    %v662 = vmul.f32 %v656, 0.2
    %v663 = vmul.f32 %v659, 0.2
    %v664 = vsel %vm660, %v656, %v662
    %v665 = vsel %vm661, %v659, %v663
    %v666 = vxor.u32 %v664, 2147483648
    %v667 = vxor.u32 %v665, 2147483648
    %v668 = vmul.f32 %v666, 1.442695
    %v669 = vpow.pop %v668
    %v670 = vmul.f32 %v667, 1.442695
    %v671 = vpow.pop %v670
    %v672 = vadd.f32 %v669, 1.0
    %v673 = vadd.f32 %v671, 1.0
    %v674 = vrcp.pop %v672
    %v675 = vmul.f32 1.0, %v674
    %v676 = vrcp.pop %v673
    %v677 = vmul.f32 1.0, %v676
    %v678 = vmax.f32 %v675, 0.01
    %v679 = vmax.f32 %v677, 0.01
    %v680 = vmin.f32 %v678, 0.99
    %v681 = vmin.f32 %v679, 0.99
    %v682 = vmul.f32 %v680, 2.0
    %v683 = vmul.f32 %v681, 2.0
    %v684 = vlog2.pop %v682
    %v685 = vmul.f32 %v684, 0.6931472
    %v686 = vlog2.pop %v683
    %v687 = vmul.f32 %v686, 0.6931472
    %v688 = vmul.f32 %v680, %v685
    %v689 = vmul.f32 %v681, %v687
    %v690 = vsub.f32 1.0, %v680
    %v691 = vsub.f32 1.0, %v681
    %v692 = vmul.f32 %v690, 2.0
    %v693 = vmul.f32 %v691, 2.0
    %v694 = vlog2.pop %v692
    %v695 = vmul.f32 %v694, 0.6931472
    %v696 = vlog2.pop %v693
    %v697 = vmul.f32 %v696, 0.6931472
    %v698 = vmul.f32 %v690, %v695
    %v699 = vmul.f32 %v691, %v697
    %v700 = vadd.f32 %v688, %v698
    %v701 = vadd.f32 %v689, %v699
    %v702 = vsel %vm355, %v700, 0.0
    %v703 = vsel %vm355, %v701, 0.0
    %v704 = vadd.f32 %v702, %v703
    %705 = vadd.xlane.f32.xlu0 %v704
    %v706 = vpop.xlane.xlu0 %705
    %v707 = vrot.slane %v706, 4
    %v708 = vadd.f32 %v706, %v707
    %v709 = vrot.slane %v708, 2
    %v710 = vadd.f32 %v708, %v709
    %v711 = vrot.slane %v710, 1
    %v712 = vadd.f32 %v710, %v711
    %s713 = vtos %v712
    %714 = vmatprep.subr.bf16.mxu0 0
    %715 = vmatpush1.bf16.msra.mxu0 %v593
    %716 = vmatprep.subr.bf16.mxu0 0
    %717 = vmatpush1.bf16.msra.mxu0 0
    %718 = vmatprep.subr.bf16.mxu0 0
    %719 = vmatpush1.bf16.msra.mxu0 0
    %720 = vmatprep.subr.bf16.mxu0 0
    %721 = vmatpush1.bf16.msra.mxu0 0
    %722 = vmatprep.subr.bf16.mxu0 0
    %723 = vmatpush1.bf16.msra.mxu0 0
    %724 = vmatprep.subr.bf16.mxu0 0
    %725 = vmatpush1.bf16.msra.mxu0 0
    %726 = vmatprep.subr.bf16.mxu0 0
    %727 = vmatpush1.bf16.msra.mxu0 0
    %728 = vmatprep.subr.bf16.mxu0 0
    %729 = vmatpush1.bf16.msra.mxu0 0
    %730 = vmatprep.subr.bf16.mxu0 0
    %731 = vmatpush1.bf16.msra.mxu0 0
    %732 = vmatprep.subr.bf16.mxu0 0
    %733 = vmatpush1.bf16.msra.mxu0 0
    %734 = vmatprep.subr.bf16.mxu0 0
    %735 = vmatpush1.bf16.msra.mxu0 0
    %736 = vmatprep.subr.bf16.mxu0 0
    %737 = vmatpush1.bf16.msra.mxu0 0
    %738 = vmatprep.subr.bf16.mxu0 0
    %739 = vmatpush1.bf16.msra.mxu0 0
    %740 = vmatprep.subr.bf16.mxu0 0
    %741 = vmatpush1.bf16.msra.mxu0 0
    %742 = vmatprep.subr.bf16.mxu0 0
    %743 = vmatpush1.bf16.msra.mxu0 0
    %744 = vmatprep.subr.bf16.mxu0 0
    %745 = vmatpush1.bf16.msra.mxu0 0
    %746 = vmatprep.mubr.bf16.mxu0 0
    %747 = vmatmul.mubr.bf16.gmra.mrb[0].mxu0 %v143
    %v748 = vpop.f32.mrb[0].mxu0
    %v749 = vadd.f32 0.0, %v748
    %v750 = vpop.f32.mrb[0].mxu0
    %v751 = vpop.f32.mrb[0].mxu0
    %v752 = vpop.f32.mrb[0].mxu0
    %753 = vdwg.mxu0
    %v754 = vpack.c.bf16 %v749, %v749
    %v756 = vsel %vm195, %v754, 0
    %758 = vmatprep.subr.bf16.mxu0 0
    %759 = vmatpush1.bf16.msra.mxu0 %v756
    %760 = vmatprep.subr.bf16.mxu0 0
    %761 = vmatpush1.bf16.msra.mxu0 0
    %762 = vmatprep.subr.bf16.mxu0 0
    %763 = vmatpush1.bf16.msra.mxu0 0
    %764 = vmatprep.subr.bf16.mxu0 0
    %765 = vmatpush1.bf16.msra.mxu0 0
    %766 = vmatprep.subr.bf16.mxu0 0
    %767 = vmatpush1.bf16.msra.mxu0 0
    %768 = vmatprep.subr.bf16.mxu0 0
    %769 = vmatpush1.bf16.msra.mxu0 0
    %770 = vmatprep.subr.bf16.mxu0 0
    %771 = vmatpush1.bf16.msra.mxu0 0
    %772 = vmatprep.subr.bf16.mxu0 0
    %773 = vmatpush1.bf16.msra.mxu0 0
    %774 = vmatprep.subr.bf16.mxu0 0
    %775 = vmatpush1.bf16.msra.mxu0 0
    %776 = vmatprep.subr.bf16.mxu0 0
    %777 = vmatpush1.bf16.msra.mxu0 0
    %778 = vmatprep.subr.bf16.mxu0 0
    %779 = vmatpush1.bf16.msra.mxu0 0
    %780 = vmatprep.subr.bf16.mxu0 0
    %781 = vmatpush1.bf16.msra.mxu0 0
    %782 = vmatprep.subr.bf16.mxu0 0
    %783 = vmatpush1.bf16.msra.mxu0 0
    %784 = vmatprep.subr.bf16.mxu0 0
    %785 = vmatpush1.bf16.msra.mxu0 0
    %786 = vmatprep.subr.bf16.mxu0 0
    %787 = vmatpush1.bf16.msra.mxu0 0
    %788 = vmatprep.subr.bf16.mxu0 0
    %789 = vmatpush1.bf16.msra.mxu0 0
    %790 = vmatprep.mubr.bf16.mxu0 0
    %791 = vmatmul.mubr.bf16.gmra.mrb[0].mxu0 %v193
    %v792 = vpop.f32.mrb[0].mxu0
    %v793 = vadd.f32 0.0, %v792
    %v794 = vpop.f32.mrb[0].mxu0
    %v795 = vpop.f32.mrb[0].mxu0
    %v796 = vadd.f32 0.0, %v795
    %v797 = vpop.f32.mrb[0].mxu0
    %798 = vdwg.mxu0
    %v799 = vpack.c.bf16 %v796, %v793
    %v800 = vld [vmem:[%s11] sm:$0xf]
    %v801 = vld [vmem:[%s11 + $0x4] sm:$0xf]
    %v802 = vld [vmem:[%s11 + $0x8] sm:$0xf]
    %v803 = vld [vmem:[%s11 + $0xc] sm:$0xf]
    %v804 = vld [vmem:[%s12] sm:$0x1]
    %v806 = vlaneseq
    %v807 = vshrl.u32 %v806, 7
    %v808 = vsub.s32 0, %v807
    %v809 = vrot.slane %v804, %v808
    %v815 = vunpack.c.l.b16 %v800
    %v816 = vunpack.c.l.b16 %v801
    %v817 = vunpack.c.l.b16 %v802
    %v818 = vunpack.c.l.b16 %v803
    %v819 = vpack.c.b16 %v816, %v815
    %v820 = vpack.c.b16 %v818, %v817
    %v824 = vsel %vm95, %v799, 0
    %826 = vmatprep.subr.bf16.mxu0 0
    %827 = vmatpush1.bf16.msra.mxu0 %v819
    %828 = vmatprep.subr.bf16.mxu0 0
    %829 = vmatpush1.bf16.msra.mxu0 %v820
    %830 = vmatprep.subr.bf16.mxu0 0
    %831 = vmatpush1.bf16.msra.mxu0 0
    %832 = vmatprep.subr.bf16.mxu0 0
    %833 = vmatpush1.bf16.msra.mxu0 0
    %834 = vmatprep.subr.bf16.mxu0 0
    %835 = vmatpush1.bf16.msra.mxu0 0
    %836 = vmatprep.subr.bf16.mxu0 0
    %837 = vmatpush1.bf16.msra.mxu0 0
    %838 = vmatprep.subr.bf16.mxu0 0
    %839 = vmatpush1.bf16.msra.mxu0 0
    %840 = vmatprep.subr.bf16.mxu0 0
    %841 = vmatpush1.bf16.msra.mxu0 0
    %842 = vmatprep.subr.bf16.mxu0 0
    %843 = vmatpush1.bf16.msra.mxu0 0
    %844 = vmatprep.subr.bf16.mxu0 0
    %845 = vmatpush1.bf16.msra.mxu0 0
    %846 = vmatprep.subr.bf16.mxu0 0
    %847 = vmatpush1.bf16.msra.mxu0 0
    %848 = vmatprep.subr.bf16.mxu0 0
    %849 = vmatpush1.bf16.msra.mxu0 0
    %850 = vmatprep.subr.bf16.mxu0 0
    %851 = vmatpush1.bf16.msra.mxu0 0
    %852 = vmatprep.subr.bf16.mxu0 0
    %853 = vmatpush1.bf16.msra.mxu0 0
    %854 = vmatprep.subr.bf16.mxu0 0
    %855 = vmatpush1.bf16.msra.mxu0 0
    %856 = vmatprep.subr.bf16.mxu0 0
    %857 = vmatpush1.bf16.msra.mxu0 0
    %858 = vmatprep.mubr.bf16.mxu0 0
    %859 = vmatmul.mubr.bf16.gmra.mrb[0].mxu0 %v824
    %v860 = vpop.f32.mrb[0].mxu0
    %v861 = vadd.f32 %v809, %v860
    %v862 = vpop.f32.mrb[0].mxu0
    %v863 = vpop.f32.mrb[0].mxu0
    %v864 = vadd.f32 %v809, %v863
    %v865 = vpop.f32.mrb[0].mxu0
    %866 = vdwg.mxu0
    %867 = vst [vmem:[%s14] sm:$0xff] %v861
    %868 = vst [vmem:[%s14 + $0x8] sm:$0xff] %v864
    %s869 = sadd.f32 %s367, %s713
    %s870 = smul.f32 %s869, 0.5
    %s871 = scalar_lea.smem [#allocation2], 0
    %872 = sst [smem:[%s871]] %s870
    // Predicated region
    $region54: #{hgib_robust_forward.1} parent=1 // pred_check
      _
    $region55: #{hgib_robust_forward.1} parent=1 // pred_check_branch
      %874 = sbr.rel (0) target = $region57
    $region56: #{hgib_robust_forward.1} parent=1 // pred_region
      _
    $region57: #{hgib_robust_forward.1} parent=1 // pred_fallthru
      _
    // Predicated region
    $region58: #{hgib_robust_forward.1} parent=1 // pred_check
      _
    $region59: #{hgib_robust_forward.1} parent=1 // pred_check_branch
      %876 = sbr.rel (0) target = $region61
    $region60: #{hgib_robust_forward.1} parent=1 // pred_region
      _
    $region61: #{hgib_robust_forward.1} parent=1 // pred_fallthru
      _
    // Predicated region
    $region62: #{hgib_robust_forward.1} parent=1 // pred_check
      _
    $region63: #{hgib_robust_forward.1} parent=1 // pred_check_branch
      %878 = sbr.rel (0) target = $region65
    $region64: #{hgib_robust_forward.1} parent=1 // pred_region
      %s880 = ssub.s32 16, 16
      %881 = vsyncadd [#allocation3], %s880
      %884 = dma.smem_to_hbm [#allocation2], 16, %s15, [#allocation3]
    $region65: #{hgib_robust_forward.1} parent=1 // pred_fallthru
      _
    // Predicated region
    $region66: #{hgib_robust_forward.1} parent=1 // pred_check
      _
    $region67: #{hgib_robust_forward.1} parent=1 // pred_check_branch
      %886 = sbr.rel (0) target = $region69
    $region68: #{hgib_robust_forward.1} parent=1 // pred_region
      _
    $region69: #{hgib_robust_forward.1} parent=1 // pred_fallthru
      _
    // Predicated region
    $region70: #{hgib_robust_forward.1} parent=1 // pred_check
      _
    $region71: #{hgib_robust_forward.1} parent=1 // pred_check_branch
      %888 = sbr.rel (0) target = $region73
    $region72: #{hgib_robust_forward.1} parent=1 // pred_region
      _
    $region73: #{hgib_robust_forward.1} parent=1 // pred_fallthru
      _
    // Predicated region
    $region74: #{hgib_robust_forward.1} parent=1 // pred_check
      _
    $region75: #{hgib_robust_forward.1} parent=1 // pred_check_branch
      %890 = sbr.rel (0) target = $region77
    $region76: #{hgib_robust_forward.1} parent=1 // pred_region
      %891 = dma.done [#allocation3], 16
    $region77: #{hgib_robust_forward.1} parent=1 // pred_fallthru
      _
    %892 = sfence
    %893 = vsyncpa [#allocation3], 1

</llo_original>
